<compile_context>
chip_gen: v6e
topology: v6e:2x2x1
jax: 0.10.0
libtpu: 0.0.40
codegen_flags: <defaults>
</compile_context>

<pallas_src>
import functools

import jax
import jax.numpy as jnp
from jax.experimental import pallas as pl
from jax.experimental.pallas import tpu as pltpu

LANE = 128      # feature dim padded to a lane-dense multiple of 128 (unmasked vst path)
TM_MAX = 512    # output-node (M) row tile
TK_MAX = 1024   # reduction (source-node) tile
# Keep x VMEM-resident only while (double-buffered) resident-x + A/out tiles stay well
# inside every generation's *default* scoped VMEM (v5e 16 MiB, v6e/v7x 32 MiB scoped,
# v7x 64 MiB physical) so no vmem_limit_bytes override is needed.
X_RESIDENT_LIMIT_BYTES = 6 * 1024 * 1024


def _round_up(n, m):
    return ((n + m - 1) // m) * m


def _choose_tiles(n):
    """Adaptive tiles: big tiles for big graphs, shrink-to-fit for small graphs."""
    tm = min(TM_MAX, _round_up(n, 128))
    # v7x has 2 TensorCores: make sure the "parallel" M axis has >= 2 tiles for graphs
    # big enough to split, instead of leaving one core idle (v5e/v6e are single-TC).
    if _round_up(n, tm) // tm < 2 and n > 128:
        tm = max(128, _round_up((n + 1) // 2, 128))
    tk = min(TK_MAX, _round_up(n, 128))
    return tm, tk


def agg_relu_kernel(a_ref, x_ref, o_ref, *, tk, x_resident):
    """grid = (M tiles, K tiles): o[tm, Fp] += bf16(A[tm, tk]) @ x[tk, Fp]; ReLU at K end.

    The output block index depends only on i, so o_ref stays VMEM-resident across the
    whole K reduction and doubles as the f32 accumulator (no scratch buffer / epilogue
    copy needed).
    """
    k = pl.program_id(1)

    @pl.when(k == 0)
    def _():
        o_ref[...] = jnp.zeros_like(o_ref)

    # A is stored as int8 in HBM (edge multiplicities <= 127 are exact); the VPU
    # upconvert to bf16 is free filler for a DMA-bound kernel.
    a = a_ref[...].astype(jnp.bfloat16)
    if x_resident:
        # x was DMAed once and kept resident in VMEM; slice the current K chunk.
        off = pl.multiple_of(k * tk, tk)
        xb = x_ref[pl.ds(off, tk), :]
    else:
        xb = x_ref[...]
    # Native bf16 x bf16 MXU matmul with f32 accumulation directly into the output.
    o_ref[...] += jnp.dot(a, xb, preferred_element_type=jnp.float32)

    @pl.when(k == pl.num_programs(1) - 1)
    def _():
        o_ref[...] = jnp.maximum(o_ref[...], 0.0)   # ReLU in place, lane-dense store


def aggregate_relu(adj_p, x_p, *, tm, tk, x_resident):
    """relu(adj_p @ x_p) on TPU.  adj_p: (m_pad, k_pad) int8, x_p: (k_pad, f_pad) bf16."""
    m_pad, k_pad = adj_p.shape
    k_pad_x, f_pad = x_p.shape
    assert k_pad_x == k_pad
    m_tiles, k_tiles = m_pad // tm, k_pad // tk

    if x_resident:
        # Full-extent block with a constant index map: x is DMAed into VMEM once and
        # reused across every (i, k) step instead of being re-streamed per M tile.
        x_spec = pl.BlockSpec((k_pad, f_pad), lambda i, k: (0, 0))
        x_bytes = k_pad * f_pad * 2
    else:
        x_spec = pl.BlockSpec((tk, f_pad), lambda i, k: (k, 0))
        x_bytes = m_tiles * k_pad * f_pad * 2

    cost = pl.CostEstimate(
        flops=2 * m_pad * k_pad * f_pad,
        transcendentals=0,
        bytes_accessed=(m_pad * k_pad            # A streamed once (int8)
                        + x_bytes                # x (bf16)
                        + m_pad * f_pad * 4),    # output (f32)
    )

    return pl.pallas_call(
        functools.partial(agg_relu_kernel, tk=tk, x_resident=x_resident),
        out_shape=jax.ShapeDtypeStruct((m_pad, f_pad), jnp.float32),
        grid_spec=pltpu.PrefetchScalarGridSpec(
            num_scalar_prefetch=0,
            grid=(m_tiles, k_tiles),
            in_specs=[
                pl.BlockSpec((tm, tk), lambda i, k: (i, k)),   # A row/col tile (int8)
                x_spec,
            ],
            out_specs=pl.BlockSpec((tm, f_pad), lambda i, k: (i, 0)),
        ),
        compiler_params=pltpu.CompilerParams(
            dimension_semantics=("parallel", "arbitrary")),  # M across TCs; K reduction
        cost_estimate=cost,
    )(adj_p, x_p)


def build_adjacency_padded(edge_index, num_nodes, m_pad, k_pad):
    """Edge list -> dense padded int8 A[dst, src] with GCNNorm self-loop handling.

    Built directly into the padded (m_pad, k_pad) int8 buffer: no separate f32
    adjacency, jnp.diag, astype or jnp.pad passes over the N^2 array.
    """
    edge_index = edge_index.astype(jnp.int32)   # stand-in for .to(torch.int64)
    src, dst = edge_index[0], edge_index[1]
    # gcn_norm's add_remaining_self_loops drops pre-existing self-loop edges ...
    not_loop = (src != dst).astype(jnp.int8)
    adj = jnp.zeros((m_pad, k_pad), jnp.int8).at[dst, src].add(not_loop)
    # ... and adds exactly one self-loop per node id in [0, max(edge_index)]
    # (num_nodes = max(edge_index) + 1, exactly as written in GCNNorm.forward).
    max_id = jnp.max(edge_index)
    ids = jnp.arange(num_nodes, dtype=jnp.int32)
    loop = (ids <= max_id).astype(jnp.int8)
    # TODO(synk): int8 counts are exact only for edge multiplicities <= 127; clamp or
    # switch to bf16 counts if heavy multigraphs are possible.
    return adj.at[ids, ids].add(loop)


@jax.jit
def combined_model_forward(x, edge_index):
    n, f = x.shape
    tm, tk = _choose_tiles(n)
    m_pad = _round_up(n, tm)        # row (dst/output) padding decoupled from ...
    k_pad = _round_up(n, tk)        # ... column (src/reduction) padding
    f_pad = _round_up(f, LANE)

    adj_p = build_adjacency_padded(edge_index, n, m_pad, k_pad)
    # bf16 x halves the x HBM stream and enables the native bf16 MXU path
    # (~1e-2 relative error vs the full-f32 PyTorch reference).
    x_p = jnp.pad(x.astype(jnp.bfloat16), ((0, k_pad - n), (0, f_pad - f)))

    x_resident = k_pad * f_pad * 2 <= X_RESIDENT_LIMIT_BYTES
    out = aggregate_relu(adj_p, x_p, tm=tm, tk=tk, x_resident=x_resident)
    # TODO(synk): for large sparse graphs (e.g. the real Flickr dataset) replace the
    # dense O(N^2) adjacency with a CSR scalar-prefetch gather/scatter-accumulate
    # kernel (PrefetchScalarGridSpec) to cut HBM traffic from O(N^2) to O(E*F).
    return out[:n, :f].astype(x.dtype)


if __name__ == "__main__":
    key = jax.random.PRNGKey(0)
    N, F, E = 64, 32, 200
    k_x, k_src, k_off = jax.random.split(key, 3)

    x = jax.random.normal(k_x, (N, F), dtype=jnp.float32)

    # deterministic random edge list with no pre-existing self-loops
    src = jax.random.randint(k_src, (E,), 0, N, dtype=jnp.int32)
    off = jax.random.randint(k_off, (E,), 1, N, dtype=jnp.int32)
    dst = (src + off) % N
    # guarantee max node id == N - 1 so num_nodes == N (matches x.shape[0])
    src = src.at[0].set(N - 1)
    dst = dst.at[0].set(0)
    edge_index = jnp.stack([src, dst])   # (2, E)

    out = jax.block_until_ready(combined_model_forward(x, edge_index))

    # Pure-JAX reference of the (self-loop augmented) gather / scatter_add / relu
    # pipeline.  Evaluated on the same bf16-rounded x the MXU consumes so the check
    # isolates kernel correctness from bf16 quantization (~1e-2 vs full-f32 torch).
    xb = x.astype(jnp.bfloat16).astype(jnp.float32)
    loop = jnp.arange(N, dtype=jnp.int32)
    keep = src != dst
    src_f = jnp.concatenate([jnp.where(keep, src, 0), loop])
    dst_f = jnp.concatenate([jnp.where(keep, dst, 0), loop])
    w_f = jnp.concatenate([keep.astype(jnp.float32), jnp.ones((N,), jnp.float32)])
    ref = jnp.zeros((N, F), jnp.float32).at[dst_f].add(w_f[:, None] * xb[src_f])
    ref = jnp.maximum(ref, 0.0)

    assert out.shape == (N, F)
    assert out.dtype == x.dtype
    assert jnp.allclose(out, ref, atol=1e-3, rtol=1e-3)

    print("KERNEL_OK")
</pallas_src>

<mosaic_0001>
module attributes {stable_mosaic.version = 11 : i64} {
  func.func @agg_relu_kernel(%arg0: i32, %arg1: i32, %arg2: memref<128x128xi8, #tpu.memory_space<vmem>>, %arg3: memref<128x128xbf16, #tpu.memory_space<vmem>>, %arg4: memref<128x128xf32, #tpu.memory_space<vmem>>) attributes {dimension_semantics = [#tpu.dimension_semantics<parallel>, #tpu.dimension_semantics<arbitrary>], iteration_bounds = array<i64: 1, 1>, scalar_prefetch = 0 : i64, scratch_operands = 0 : i64, tpu.core_type = #tpu.core_type<tc>, window_params = [{transform_indices = @transform_0, window_bounds = array<i64: 128, 128>}, {pipeline_mode = #tpu.pipeline_mode<synchronous>, transform_indices = @transform_1, window_bounds = array<i64: 128, 128>}, {transform_indices = @transform_2, window_bounds = array<i64: 128, 128>}]} {
    %c0_i32 = arith.constant 0 : i32
    %0 = arith.cmpi eq, %arg1, %c0_i32 : i32
    %1 = arith.extui %0 : i1 to i32
    %c0_i32_0 = arith.constant 0 : i32
    %2 = arith.cmpi ne, %1, %c0_i32_0 : i32
    scf.if %2 {
      %cst_9 = arith.constant 0.000000e+00 : f32
      %16 = vector.broadcast %cst_9 : f32 to vector<128x128xf32>
      %c0_10 = arith.constant 0 : index
      %c0_11 = arith.constant 0 : index
      %17 = vector.load %arg4[%c0_10, %c0_11] : memref<128x128xf32, #tpu.memory_space<vmem>>, vector<128x128xf32>
      tpu.vector_store %arg4[%c0_10, %c0_11], %16 {strides = array<i32>} : memref<128x128xf32, #tpu.memory_space<vmem>>, vector<128x128xf32>,
    } else {
    }
    %c0 = arith.constant 0 : index
    %c0_1 = arith.constant 0 : index
    %3 = vector.load %arg2[%c0, %c0_1] : memref<128x128xi8, #tpu.memory_space<vmem>>, vector<128x128xi8>
    %4 = arith.sitofp %3 : vector<128x128xi8> to vector<128x128xbf16>
    %c128_i32 = arith.constant 128 : i32
    %5 = arith.muli %arg1, %c128_i32 : i32
    %6 = tpu.assume_multiple %5, 128 : i32
    %7 = arith.index_cast %6 : i32 to index
    %c0_2 = arith.constant 0 : index
    %8 = vector.load %arg3[%7, %c0_2] : memref<128x128xbf16, #tpu.memory_space<vmem>>, vector<128x128xbf16>
    %c0_3 = arith.constant 0 : index
    %c0_4 = arith.constant 0 : index
    %9 = vector.load %arg4[%c0_3, %c0_4] : memref<128x128xf32, #tpu.memory_space<vmem>>, vector<128x128xf32>
    %cst = arith.constant dense<0.000000e+00> : vector<128x128xf32>
    %10 = tpu.matmul %4, %8, %cst {dimension_numbers = #tpu.dot_dimension_numbers<[1], [0], [0], [1], [0, 0, 1, 1], [], []>} : vector<128x128xbf16>, vector<128x128xbf16>, vector<128x128xf32> -> vector<128x128xf32>
    %11 = arith.addf %9, %10 : vector<128x128xf32>
    %c0_5 = arith.constant 0 : index
    %c0_6 = arith.constant 0 : index
    %12 = vector.load %arg4[%c0_5, %c0_6] : memref<128x128xf32, #tpu.memory_space<vmem>>, vector<128x128xf32>
    tpu.vector_store %arg4[%c0_5, %c0_6], %11 {strides = array<i32>} : memref<128x128xf32, #tpu.memory_space<vmem>>, vector<128x128xf32>,
    %c0_i32_7 = arith.constant 0 : i32
    %13 = arith.cmpi eq, %arg1, %c0_i32_7 : i32
    %14 = arith.extui %13 : i1 to i32
    %c0_i32_8 = arith.constant 0 : i32
    %15 = arith.cmpi ne, %14, %c0_i32_8 : i32
    scf.if %15 {
      %c0_9 = arith.constant 0 : index
      %c0_10 = arith.constant 0 : index
      %16 = vector.load %arg4[%c0_9, %c0_10] : memref<128x128xf32, #tpu.memory_space<vmem>>, vector<128x128xf32>
      %cst_11 = arith.constant 0.000000e+00 : f32
      %17 = vector.broadcast %cst_11 : f32 to vector<128x128xf32>
      %18 = arith.maximumf %16, %17 : vector<128x128xf32>
      %c0_12 = arith.constant 0 : index
      %c0_13 = arith.constant 0 : index
      %19 = vector.load %arg4[%c0_12, %c0_13] : memref<128x128xf32, #tpu.memory_space<vmem>>, vector<128x128xf32>
      tpu.vector_store %arg4[%c0_12, %c0_13], %18 {strides = array<i32>} : memref<128x128xf32, #tpu.memory_space<vmem>>, vector<128x128xf32>,
    } else {
    }
    return
  }
  func.func @transform_0(%arg0: i32, %arg1: i32) -> (i32, i32) {
    %c0_i32 = arith.constant 0 : i32
    return %arg0, %arg1 : i32, i32
  }
  func.func @transform_1(%arg0: i32, %arg1: i32) -> (i32, i32) {
    %c0_i32 = arith.constant 0 : i32
    %c0_i32_0 = arith.constant 0 : i32
    %c0_i32_1 = arith.constant 0 : i32
    return %c0_i32, %c0_i32_0 : i32, i32
  }
  func.func @transform_2(%arg0: i32, %arg1: i32) -> (i32, i32) {
    %c0_i32 = arith.constant 0 : i32
    %c0_i32_0 = arith.constant 0 : i32
    return %arg0, %c0_i32 : i32, i32
  }
}

</mosaic_0001>

<llo_original>
// kernel: combined_model_forward.1
$region0: #{combined_model_forward.1}
  #allocation0 [shape = 'u32[]', space=smem, size = 0x4, offset = 0x4, fixed_abs, tag = 'smem constant byte address 0x4 - core index']
  #allocation1 [shape = 'u32[144,128]{1,0:T(1,128)}', space=vmem, size = 0x12000, scoped, tag = 'internal scratch']
  %s0 = inlined_call_operand.vmem [shape: s8[128,128], index: 0, kind: input, shape index: {}]
  %s1 = inlined_call_operand.vmem [shape: bf16[128,128], index: 1, kind: input, shape index: {}]
  %s2 = inlined_call_operand.vmem [shape: f32[128,128], index: 2, kind: output, shape index: {}]
  %s3 = sld [smem:[#allocation0]]
  $region26: #{combined_model_forward.1} parent=0
    _
  %s5 = ssub.s32 1, %s3
  %s6 = scalar_select 0, %s5, %s3
  // Predicated region
  $region2: #{combined_model_forward.1} parent=0 // pred_check
    _
  $region3: #{combined_model_forward.1} parent=0 // pred_check_branch
    %8 = sbr.rel (0) target = $region5
  $region4: #{combined_model_forward.1} parent=0 // pred_region
    _
  $region5: #{combined_model_forward.1} parent=0 // pred_fallthru
    _
  // Predicated region
  $region6: #{combined_model_forward.1} parent=0 // pred_check
    _
  $region7: #{combined_model_forward.1} parent=0 // pred_check_branch
    %10 = sbr.rel (0) target = $region9
  $region8: #{combined_model_forward.1} parent=0 // pred_region
    _
  $region9: #{combined_model_forward.1} parent=0 // pred_fallthru
    _
  %p12 = scmp.eq.s32.totalorder 0, 0
  // Predicated region
  $region10: #{combined_model_forward.1} parent=0 // pred_check
    %p13 = pneg %p12
  $region11: #{combined_model_forward.1} parent=0 // pred_check_branch
    %15 = sbr.rel (%p13) target = $region13
  $region12: #{combined_model_forward.1} parent=0 // pred_region
    %16 = vst [vmem:[%s2] sm:$0xff] 0.0
    %17 = vst [vmem:[%s2 + $0x8] sm:$0xff] 0.0
    %18 = vst [vmem:[%s2 + $0x10] sm:$0xff] 0.0
    %19 = vst [vmem:[%s2 + $0x18] sm:$0xff] 0.0
    %20 = vst [vmem:[%s2 + $0x20] sm:$0xff] 0.0
    %21 = vst [vmem:[%s2 + $0x28] sm:$0xff] 0.0
    %22 = vst [vmem:[%s2 + $0x30] sm:$0xff] 0.0
    %23 = vst [vmem:[%s2 + $0x38] sm:$0xff] 0.0
    %24 = vst [vmem:[%s2 + $0x40] sm:$0xff] 0.0
    %25 = vst [vmem:[%s2 + $0x48] sm:$0xff] 0.0
    %26 = vst [vmem:[%s2 + $0x50] sm:$0xff] 0.0
    %27 = vst [vmem:[%s2 + $0x58] sm:$0xff] 0.0
    %28 = vst [vmem:[%s2 + $0x60] sm:$0xff] 0.0
    %29 = vst [vmem:[%s2 + $0x68] sm:$0xff] 0.0
    %30 = vst [vmem:[%s2 + $0x70] sm:$0xff] 0.0
    %31 = vst [vmem:[%s2 + $0x78] sm:$0xff] 0.0
  $region13: #{combined_model_forward.1} parent=0 // pred_fallthru
    _
  %v32 = vld [vmem:[%s0] sm:$0x3]
  %v33 = vld [vmem:[%s0 + $0x2] sm:$0x3]
  %v34 = vld [vmem:[%s0 + $0x4] sm:$0x3]
  %v35 = vld [vmem:[%s0 + $0x6] sm:$0x3]
  %v36 = vld [vmem:[%s0 + $0x8] sm:$0x3]
  %v37 = vld [vmem:[%s0 + $0xa] sm:$0x3]
  %v38 = vld [vmem:[%s0 + $0xc] sm:$0x3]
  %v39 = vld [vmem:[%s0 + $0xe] sm:$0x3]
  %v40 = vld [vmem:[%s0 + $0x10] sm:$0x3]
  %v41 = vld [vmem:[%s0 + $0x12] sm:$0x3]
  %v42 = vld [vmem:[%s0 + $0x14] sm:$0x3]
  %v43 = vld [vmem:[%s0 + $0x16] sm:$0x3]
  %v44 = vld [vmem:[%s0 + $0x18] sm:$0x3]
  %v45 = vld [vmem:[%s0 + $0x1a] sm:$0x3]
  %v46 = vld [vmem:[%s0 + $0x1c] sm:$0x3]
  %v47 = vld [vmem:[%s0 + $0x1e] sm:$0x3]
  %v48 = vunpack.c.l.s8.bf16 %v32
  %v49 = vunpack.c.l.s8.bf16 %v33
  %v50 = vunpack.c.l.s8.bf16 %v34
  %v51 = vunpack.c.l.s8.bf16 %v35
  %v52 = vunpack.c.l.s8.bf16 %v36
  %v53 = vunpack.c.l.s8.bf16 %v37
  %v54 = vunpack.c.l.s8.bf16 %v38
  %v55 = vunpack.c.l.s8.bf16 %v39
  %v56 = vunpack.c.l.s8.bf16 %v40
  %v57 = vunpack.c.l.s8.bf16 %v41
  %v58 = vunpack.c.l.s8.bf16 %v42
  %v59 = vunpack.c.l.s8.bf16 %v43
  %v60 = vunpack.c.l.s8.bf16 %v44
  %v61 = vunpack.c.l.s8.bf16 %v45
  %v62 = vunpack.c.l.s8.bf16 %v46
  %v63 = vunpack.c.l.s8.bf16 %v47
  %s64 = smul.u32 0, 128
  %s65 = sshra.s32 %s64, 3
  %s66 = sand.u32 %s64, 7
  %s67 = smul.addr %s65, 4
  %s68 = scalar_lea.vmem %s1, %s67
  %v69 = vld [vmem:[%s68] sm:$0xf]
  %v70 = vld [vmem:[%s68 + $0x4] sm:$0xf]
  %v71 = vld [vmem:[%s68 + $0x8] sm:$0xf]
  %v72 = vld [vmem:[%s68 + $0xc] sm:$0xf]
  %v73 = vld [vmem:[%s68 + $0x10] sm:$0xf]
  %v74 = vld [vmem:[%s68 + $0x14] sm:$0xf]
  %v75 = vld [vmem:[%s68 + $0x18] sm:$0xf]
  %v76 = vld [vmem:[%s68 + $0x1c] sm:$0xf]
  %v77 = vld [vmem:[%s68 + $0x20] sm:$0xf]
  %v78 = vld [vmem:[%s68 + $0x24] sm:$0xf]
  %v79 = vld [vmem:[%s68 + $0x28] sm:$0xf]
  %v80 = vld [vmem:[%s68 + $0x2c] sm:$0xf]
  %v81 = vld [vmem:[%s68 + $0x30] sm:$0xf]
  %v82 = vld [vmem:[%s68 + $0x34] sm:$0xf]
  %v83 = vld [vmem:[%s68 + $0x38] sm:$0xf]
  %v84 = vld [vmem:[%s68 + $0x3c] sm:$0xf]
  %v85 = vld [vmem:[%s2] sm:$0xff]
  %v86 = vld [vmem:[%s2 + $0x8] sm:$0xff]
  %v87 = vld [vmem:[%s2 + $0x10] sm:$0xff]
  %v88 = vld [vmem:[%s2 + $0x18] sm:$0xff]
  %v89 = vld [vmem:[%s2 + $0x20] sm:$0xff]
  %v90 = vld [vmem:[%s2 + $0x28] sm:$0xff]
  %v91 = vld [vmem:[%s2 + $0x30] sm:$0xff]
  %v92 = vld [vmem:[%s2 + $0x38] sm:$0xff]
  %v93 = vld [vmem:[%s2 + $0x40] sm:$0xff]
  %v94 = vld [vmem:[%s2 + $0x48] sm:$0xff]
  %v95 = vld [vmem:[%s2 + $0x50] sm:$0xff]
  %v96 = vld [vmem:[%s2 + $0x58] sm:$0xff]
  %v97 = vld [vmem:[%s2 + $0x60] sm:$0xff]
  %v98 = vld [vmem:[%s2 + $0x68] sm:$0xff]
  %v99 = vld [vmem:[%s2 + $0x70] sm:$0xff]
  %v100 = vld [vmem:[%s2 + $0x78] sm:$0xff]
  %v117 = vunpack.c.l.b16 %v48
  %v118 = vunpack.c.l.b16 %v49
  %v119 = vunpack.c.l.b16 %v50
  %v120 = vunpack.c.l.b16 %v51
  %v121 = vunpack.c.l.b16 %v52
  %v122 = vunpack.c.l.b16 %v53
  %v123 = vunpack.c.l.b16 %v54
  %v124 = vunpack.c.l.b16 %v55
  %v125 = vunpack.c.l.b16 %v56
  %v126 = vunpack.c.l.b16 %v57
  %v127 = vunpack.c.l.b16 %v58
  %v128 = vunpack.c.l.b16 %v59
  %v129 = vunpack.c.l.b16 %v60
  %v130 = vunpack.c.l.b16 %v61
  %v131 = vunpack.c.l.b16 %v62
  %v132 = vunpack.c.l.b16 %v63
  %v133 = vpack.c.b16 %v118, %v117
  %v134 = vpack.c.b16 %v120, %v119
  %v135 = vpack.c.b16 %v122, %v121
  %v136 = vpack.c.b16 %v124, %v123
  %v137 = vpack.c.b16 %v126, %v125
  %v138 = vpack.c.b16 %v128, %v127
  %v139 = vpack.c.b16 %v130, %v129
  %v140 = vpack.c.b16 %v132, %v131
  %v165 = vunpack.c.l.b16 %v69
  %v166 = vunpack.c.l.b16 %v70
  %v167 = vunpack.c.l.b16 %v71
  %v168 = vunpack.c.l.b16 %v72
  %v169 = vunpack.c.l.b16 %v73
  %v170 = vunpack.c.l.b16 %v74
  %v171 = vunpack.c.l.b16 %v75
  %v172 = vunpack.c.l.b16 %v76
  %v173 = vunpack.c.l.b16 %v77
  %v174 = vunpack.c.l.b16 %v78
  %v175 = vunpack.c.l.b16 %v79
  %v176 = vunpack.c.l.b16 %v80
  %v177 = vunpack.c.l.b16 %v81
  %v178 = vunpack.c.l.b16 %v82
  %v179 = vunpack.c.l.b16 %v83
  %v180 = vunpack.c.l.b16 %v84
  %v181 = vpack.c.b16 %v166, %v165
  %v182 = vpack.c.b16 %v168, %v167
  %v183 = vpack.c.b16 %v170, %v169
  %v184 = vpack.c.b16 %v172, %v171
  %v185 = vpack.c.b16 %v174, %v173
  %v186 = vpack.c.b16 %v176, %v175
  %v187 = vpack.c.b16 %v178, %v177
  %v188 = vpack.c.b16 %v180, %v179
  %197 = vmatprep.subr.bf16.mxu0 0
  %198 = vmatpush1.bf16.msra.mxu0 %v188
  %199 = vmatprep.subr.bf16.mxu0 0
  %200 = vmatpush1.bf16.msra.mxu0 %v187
  %201 = vmatprep.subr.bf16.mxu0 0
  %202 = vmatpush1.bf16.msra.mxu0 %v186
  %203 = vmatprep.subr.bf16.mxu0 0
  %204 = vmatpush1.bf16.msra.mxu0 %v185
  %205 = vmatprep.subr.bf16.mxu0 0
  %206 = vmatpush1.bf16.msra.mxu0 %v184
  %207 = vmatprep.subr.bf16.mxu0 0
  %208 = vmatpush1.bf16.msra.mxu0 %v183
  %209 = vmatprep.subr.bf16.mxu0 0
  %210 = vmatpush1.bf16.msra.mxu0 %v182
  %211 = vmatprep.subr.bf16.mxu0 0
  %212 = vmatpush1.bf16.msra.mxu0 %v181
  %213 = vmatprep.subr.bf16.mxu0 0
  %214 = vmatpush2.bf16.msra.mxu0 0
  %215 = vmatprep.subr.bf16.mxu0 0
  %216 = vmatpush2.bf16.msra.mxu0 0
  %217 = vmatprep.subr.bf16.mxu0 0
  %218 = vmatpush2.bf16.msra.mxu0 0
  %219 = vmatprep.subr.bf16.mxu0 0
  %220 = vmatpush2.bf16.msra.mxu0 0
  %221 = vmatprep.subr.bf16.mxu0 0
  %222 = vmatpush2.bf16.msra.mxu0 0
  %223 = vmatprep.subr.bf16.mxu0 0
  %224 = vmatpush2.bf16.msra.mxu0 0
  %225 = vmatprep.subr.bf16.mxu0 0
  %226 = vmatpush2.bf16.msra.mxu0 0
  %227 = vmatprep.subr.bf16.mxu0 0
  %228 = vmatpush2.bf16.msra.mxu0 0
  %229 = vmatprep.mubr.bf16.mxu0 0
  %230 = vmatmul.mubr.bf16.gmra.mxu0 %v133
  %v231 = vpop.f32.mrf.mxu0
  %v232 = vadd.f32 0.0, %v231
  %v233 = vpop.f32.mrf.mxu0
  %v234 = vpop.f32.mrf.mxu0
  %v235 = vadd.f32 0.0, %v234
  %v236 = vpop.f32.mrf.mxu0
  %237 = vmatprep.mubr.bf16.mxu0 0
  %238 = vmatmul.mubr.bf16.gmra.mxu0 %v134
  %v239 = vpop.f32.mrf.mxu0
  %v240 = vadd.f32 0.0, %v239
  %v241 = vpop.f32.mrf.mxu0
  %v242 = vpop.f32.mrf.mxu0
  %v243 = vadd.f32 0.0, %v242
  %v244 = vpop.f32.mrf.mxu0
  %245 = vmatprep.mubr.bf16.mxu0 0
  %246 = vmatmul.mubr.bf16.gmra.mxu0 %v135
  %v247 = vpop.f32.mrf.mxu0
  %v248 = vadd.f32 0.0, %v247
  %v249 = vpop.f32.mrf.mxu0
  %v250 = vpop.f32.mrf.mxu0
  %v251 = vadd.f32 0.0, %v250
  %v252 = vpop.f32.mrf.mxu0
  %253 = vmatprep.mubr.bf16.mxu0 0
  %254 = vmatmul.mubr.bf16.gmra.mxu0 %v136
  %v255 = vpop.f32.mrf.mxu0
  %v256 = vadd.f32 0.0, %v255
  %v257 = vpop.f32.mrf.mxu0
  %v258 = vpop.f32.mrf.mxu0
  %v259 = vadd.f32 0.0, %v258
  %v260 = vpop.f32.mrf.mxu0
  %261 = vmatprep.mubr.bf16.mxu0 0
  %262 = vmatmul.mubr.bf16.gmra.mxu0 %v137
  %v263 = vpop.f32.mrf.mxu0
  %v264 = vadd.f32 0.0, %v263
  %v265 = vpop.f32.mrf.mxu0
  %v266 = vpop.f32.mrf.mxu0
  %v267 = vadd.f32 0.0, %v266
  %v268 = vpop.f32.mrf.mxu0
  %269 = vmatprep.mubr.bf16.mxu0 0
  %270 = vmatmul.mubr.bf16.gmra.mxu0 %v138
  %v271 = vpop.f32.mrf.mxu0
  %v272 = vadd.f32 0.0, %v271
  %v273 = vpop.f32.mrf.mxu0
  %v274 = vpop.f32.mrf.mxu0
  %v275 = vadd.f32 0.0, %v274
  %v276 = vpop.f32.mrf.mxu0
  %277 = vmatprep.mubr.bf16.mxu0 0
  %278 = vmatmul.mubr.bf16.gmra.mxu0 %v139
  %v279 = vpop.f32.mrf.mxu0
  %v280 = vadd.f32 0.0, %v279
  %v281 = vpop.f32.mrf.mxu0
  %v282 = vpop.f32.mrf.mxu0
  %v283 = vadd.f32 0.0, %v282
  %v284 = vpop.f32.mrf.mxu0
  %285 = vmatprep.mubr.bf16.mxu0 0
  %286 = vmatmul.mubr.bf16.gmra.mxu0 %v140
  %v287 = vpop.f32.mrf.mxu0
  %v288 = vadd.f32 0.0, %v287
  %v289 = vpop.f32.mrf.mxu0
  %v290 = vpop.f32.mrf.mxu0
  %v291 = vadd.f32 0.0, %v290
  %v292 = vpop.f32.mrf.mxu0
  %293 = vdwg.mxu0
  %v294 = vadd.f32 %v85, %v232
  %v295 = vadd.f32 %v86, %v235
  %v296 = vadd.f32 %v87, %v240
  %v297 = vadd.f32 %v88, %v243
  %v298 = vadd.f32 %v89, %v248
  %v299 = vadd.f32 %v90, %v251
  %v300 = vadd.f32 %v91, %v256
  %v301 = vadd.f32 %v92, %v259
  %v302 = vadd.f32 %v93, %v264
  %v303 = vadd.f32 %v94, %v267
  %v304 = vadd.f32 %v95, %v272
  %v305 = vadd.f32 %v96, %v275
  %v306 = vadd.f32 %v97, %v280
  %v307 = vadd.f32 %v98, %v283
  %v308 = vadd.f32 %v99, %v288
  %v309 = vadd.f32 %v100, %v291
  %310 = vst [vmem:[%s2] sm:$0xff] %v294
  %311 = vst [vmem:[%s2 + $0x8] sm:$0xff] %v295
  %312 = vst [vmem:[%s2 + $0x10] sm:$0xff] %v296
  %313 = vst [vmem:[%s2 + $0x18] sm:$0xff] %v297
  %314 = vst [vmem:[%s2 + $0x20] sm:$0xff] %v298
  %315 = vst [vmem:[%s2 + $0x28] sm:$0xff] %v299
  %316 = vst [vmem:[%s2 + $0x30] sm:$0xff] %v300
  %317 = vst [vmem:[%s2 + $0x38] sm:$0xff] %v301
  %318 = vst [vmem:[%s2 + $0x40] sm:$0xff] %v302
  %319 = vst [vmem:[%s2 + $0x48] sm:$0xff] %v303
  %320 = vst [vmem:[%s2 + $0x50] sm:$0xff] %v304
  %321 = vst [vmem:[%s2 + $0x58] sm:$0xff] %v305
  %322 = vst [vmem:[%s2 + $0x60] sm:$0xff] %v306
  %323 = vst [vmem:[%s2 + $0x68] sm:$0xff] %v307
  %324 = vst [vmem:[%s2 + $0x70] sm:$0xff] %v308
  %325 = vst [vmem:[%s2 + $0x78] sm:$0xff] %v309
  // Predicated region
  $region14: #{combined_model_forward.1} parent=0 // pred_check
    %p326 = pneg %p12
  $region15: #{combined_model_forward.1} parent=0 // pred_check_branch
    %328 = sbr.rel (%p326) target = $region17
  $region16: #{combined_model_forward.1} parent=0 // pred_region
    %v329 = vld [vmem:[%s2] sm:$0xff]
    %v330 = vld [vmem:[%s2 + $0x8] sm:$0xff]
    %v331 = vld [vmem:[%s2 + $0x10] sm:$0xff]
    %v332 = vld [vmem:[%s2 + $0x18] sm:$0xff]
    %v333 = vld [vmem:[%s2 + $0x20] sm:$0xff]
    %v334 = vld [vmem:[%s2 + $0x28] sm:$0xff]
    %v335 = vld [vmem:[%s2 + $0x30] sm:$0xff]
    %v336 = vld [vmem:[%s2 + $0x38] sm:$0xff]
    %v337 = vld [vmem:[%s2 + $0x40] sm:$0xff]
    %v338 = vld [vmem:[%s2 + $0x48] sm:$0xff]
    %v339 = vld [vmem:[%s2 + $0x50] sm:$0xff]
    %v340 = vld [vmem:[%s2 + $0x58] sm:$0xff]
    %v341 = vld [vmem:[%s2 + $0x60] sm:$0xff]
    %v342 = vld [vmem:[%s2 + $0x68] sm:$0xff]
    %v343 = vld [vmem:[%s2 + $0x70] sm:$0xff]
    %v344 = vld [vmem:[%s2 + $0x78] sm:$0xff]
    %v345 = vmax.f32 %v329, 0.0
    %v346 = vmax.f32 %v330, 0.0
    %v347 = vmax.f32 %v331, 0.0
    %v348 = vmax.f32 %v332, 0.0
    %v349 = vmax.f32 %v333, 0.0
    %v350 = vmax.f32 %v334, 0.0
    %v351 = vmax.f32 %v335, 0.0
    %v352 = vmax.f32 %v336, 0.0
    %v353 = vmax.f32 %v337, 0.0
    %v354 = vmax.f32 %v338, 0.0
    %v355 = vmax.f32 %v339, 0.0
    %v356 = vmax.f32 %v340, 0.0
    %v357 = vmax.f32 %v341, 0.0
    %v358 = vmax.f32 %v342, 0.0
    %v359 = vmax.f32 %v343, 0.0
    %v360 = vmax.f32 %v344, 0.0
    %361 = vst [vmem:[%s2] sm:$0xff] %v345
    %362 = vst [vmem:[%s2 + $0x8] sm:$0xff] %v346
    %363 = vst [vmem:[%s2 + $0x10] sm:$0xff] %v347
    %364 = vst [vmem:[%s2 + $0x18] sm:$0xff] %v348
    %365 = vst [vmem:[%s2 + $0x20] sm:$0xff] %v349
    %366 = vst [vmem:[%s2 + $0x28] sm:$0xff] %v350
    %367 = vst [vmem:[%s2 + $0x30] sm:$0xff] %v351
    %368 = vst [vmem:[%s2 + $0x38] sm:$0xff] %v352
    %369 = vst [vmem:[%s2 + $0x40] sm:$0xff] %v353
    %370 = vst [vmem:[%s2 + $0x48] sm:$0xff] %v354
    %371 = vst [vmem:[%s2 + $0x50] sm:$0xff] %v355
    %372 = vst [vmem:[%s2 + $0x58] sm:$0xff] %v356
    %373 = vst [vmem:[%s2 + $0x60] sm:$0xff] %v357
    %374 = vst [vmem:[%s2 + $0x68] sm:$0xff] %v358
    %375 = vst [vmem:[%s2 + $0x70] sm:$0xff] %v359
    %376 = vst [vmem:[%s2 + $0x78] sm:$0xff] %v360
  $region17: #{combined_model_forward.1} parent=0 // pred_fallthru
    _
  // Predicated region
  $region18: #{combined_model_forward.1} parent=0 // pred_check
    _
  $region19: #{combined_model_forward.1} parent=0 // pred_check_branch
    %378 = sbr.rel (0) target = $region21
  $region20: #{combined_model_forward.1} parent=0 // pred_region
    _
  $region21: #{combined_model_forward.1} parent=0 // pred_fallthru
    _
  // Predicated region
  $region22: #{combined_model_forward.1} parent=0 // pred_check
    _
  $region23: #{combined_model_forward.1} parent=0 // pred_check_branch
    %380 = sbr.rel (0) target = $region25
  $region24: #{combined_model_forward.1} parent=0 // pred_region
    _
  $region25: #{combined_model_forward.1} parent=0 // pred_fallthru
    _

</llo_original>
